<compile_context>
chip_gen: v5e
topology: v5e:2x2
jax: 0.10.0
libtpu: 0.0.40
codegen_flags: <defaults>
</compile_context>

<pallas_src>
import functools
import numpy as np

import jax
import jax.numpy as jnp
from jax.experimental import pallas as pl
from jax.experimental.pallas import tpu as pltpu


# ----------------------------------------------------------------------------
# Host-side glue: deterministic FixedQuadTree stand-in + resample index tables
# ----------------------------------------------------------------------------
def _quadtree_leaves(edges, fixed_length):
    """Greedy quadtree: repeatedly split the leaf with the largest edge mass
    until exactly `fixed_length` leaves exist.  Deterministic stand-in for
    FixedQuadTree(domain=edges, fixed_length=...)."""
    H, W = edges.shape
    assert H == W, "square domain expected"
    assert (fixed_length - 1) % 3 == 0, "fixed_length must be of the form 1 + 3k"
    leaves = [(0, 0, H)]  # (y, x, size)
    while len(leaves) < fixed_length:
        best_i, best_score = -1, -1.0
        for i, (y, x, s) in enumerate(leaves):
            if s >= 2:
                sc = float(edges[y:y + s, x:x + s].sum())
                if sc > best_score:
                    best_i, best_score = i, sc
        y, x, s = leaves.pop(best_i)
        h = s // 2
        leaves.extend([(y, x, h), (y, x + h, h), (y + h, x, h), (y + h, x + h, h)])
    return leaves


def _leaf_rowcol_indices(leaves, patch_size):
    """Nearest-neighbour resample, *separable* form.

    Returns two (1, L*P*P) int32 tables: for output element m = l*P*P + i*P + j
      row_flat[m] = y_l + (i * s_l) // P     (row in the image)
      col_flat[m] = x_l + (j * s_l) // P     (col in the image)
    """
    L, P = len(leaves), patch_size
    ar = np.arange(P)
    rows = np.zeros((L, P), np.int32)
    cols = np.zeros((L, P), np.int32)
    for l, (y, x, s) in enumerate(leaves):
        rows[l] = y + (ar * s) // P
        cols[l] = x + (ar * s) // P
    row_flat = np.broadcast_to(rows[:, :, None], (L, P, P)).reshape(1, -1)
    col_flat = np.broadcast_to(cols[:, None, :], (L, P, P)).reshape(1, -1)
    return row_flat.astype(np.int32), col_flat.astype(np.int32)


# ----------------------------------------------------------------------------
# Pallas kernel: fused, separable one-hot gather (single grid step)
# ----------------------------------------------------------------------------
def _serialize_kernel(row_idx_ref, col_idx_ref, img_ref, out_ref, *, H, W, C, M):
    # row_idx_ref / col_idx_ref : (1, M) int32   (M = L * P * P, lane-dense)
    # img_ref                   : (C*H, W) f32   packed image+mask, channel-major
    # out_ref                   : (C, M)  f32    transposed gather result (lane-dense)
    row_idx = row_idx_ref[0, :]                                       # (M,)
    col_idx = col_idx_ref[0, :]                                       # (M,)

    # Separable one-hots: O((H + W) * M) compares instead of O(H * W * M).
    cone_t = (jax.lax.broadcasted_iota(jnp.int32, (W, M), 0)
              == col_idx[None, :]).astype(jnp.float32)                # (W, M)
    rone_t = (jax.lax.broadcasted_iota(jnp.int32, (H, M), 0)
              == row_idx[None, :]).astype(jnp.float32)                # (H, M)

    # Column gather on the MXU: (C*H, W) @ (W, M) -> (C*H, M), lane-dense.
    colg = jnp.dot(img_ref[...], cone_t, preferred_element_type=jnp.float32)

    # Row selection: rone_t has exactly one 1 per column, so the masked
    # column-sum below is an exact (f32) gather, not an approximation.
    outs = []
    for c in range(C):  # C is tiny (4); unrolled at trace time
        colg_c = colg[c * H:(c + 1) * H, :]                           # static, 8-aligned
        outs.append(jnp.sum(rone_t * colg_c, axis=0, keepdims=True))  # (1, M)
    out_ref[...] = jnp.concatenate(outs, axis=0)                      # (C, M)


def serialize_pallas(img_chw2d, row_idx, col_idx, *, H):
    """img_chw2d: (C*H, W) f32, row_idx/col_idx: (1, M) i32 -> (C, M) f32."""
    CH, W = img_chw2d.shape
    C = CH // H
    _, M = row_idx.shape
    kernel = functools.partial(_serialize_kernel, H=H, W=W, C=C, M=M)
    return pl.pallas_call(
        kernel,
        out_shape=jax.ShapeDtypeStruct((C, M), jnp.float32),
        grid=(1,),  # single fused step: no per-leaf grid overhead
        in_specs=[
            pl.BlockSpec((1, M), lambda i: (0, 0)),        # row index table
            pl.BlockSpec((1, M), lambda i: (0, 0)),        # col index table
            pl.BlockSpec((CH, W), lambda i: (0, 0)),       # packed image (resident)
        ],
        out_specs=pl.BlockSpec((C, M), lambda i: (0, 0)),
        compiler_params=pltpu.CompilerParams(
            # Single step -> nothing to megacore-shard; keep it "arbitrary".
            dimension_semantics=("arbitrary",),
            # Kernel footprint is < 1 MiB at these shapes and scales with
            # (H + W) * M, not H * W * M; limit set explicitly for headroom
            # on larger images (safe on v5e/v6e/v7x).
            vmem_limit_bytes=32 * 1024 * 1024,
        ),
    )(row_idx, col_idx, img_chw2d)


# ----------------------------------------------------------------------------
# Module wrapper
# ----------------------------------------------------------------------------
class SegPatchifyPallas:
    def __init__(self, sths=(0, 1, 3, 5), fixed_length=16, cannys=(50, 100),
                 patch_size=8):
        self.sths = list(sths)
        self.fixed_length = fixed_length
        self.cannys = list(range(cannys[0], cannys[1], 1))
        self.patch_size = patch_size
        self._last_xflat = None
        self._last_rowcol = None

    def __call__(self, img, mask, key):
        # Deterministic choices (the reference uses random.choice):
        self.smooth_factor = 0
        c = self.cannys[0]
        self.canny = [c, c + 50]
        # TODO(synk): the smooth_factor != 0 branch (cv2.GaussianBlur + cv2.Canny)
        # has no Pallas equivalent; only the smooth_factor == 0 branch (uniform
        # random edge map) is implemented.
        H, W = int(img.shape[0]), int(img.shape[1])
        edges = np.asarray(jax.random.uniform(key, (H, W), dtype=jnp.float32))

        # Host-side quadtree (data-dependent, sequential) + separable index tables.
        # NOTE: for real throughput, batch multiple images per pallas_call (leading
        # "parallel" grid axis) -- the device kernel is microseconds and the host
        # quadtree / per-call uploads dominate end-to-end latency.
        leaves = _quadtree_leaves(edges, self.fixed_length)
        row_np, col_np = _leaf_rowcol_indices(leaves, self.patch_size)  # (1, M) each
        row_idx = jnp.asarray(row_np)
        col_idx = jnp.asarray(col_np)

        # Pack img (3 channels) and mask (1 channel) into one channel-major slab.
        x = jnp.concatenate(
            [img.astype(jnp.float32), mask.astype(jnp.float32)], axis=-1)   # (H, W, 4)
        C = x.shape[-1]
        x_chw2d = jnp.transpose(x, (2, 0, 1)).reshape(C * H, W)             # (C*H, W)

        self._last_xflat = x.reshape(H * W, C)
        self._last_rowcol = (row_np, col_np)

        out_t = serialize_pallas(x_chw2d, row_idx, col_idx, H=H)            # (C, M)

        P, L = self.patch_size, self.fixed_length
        seq = out_t.T.reshape(L, P, P, C)                                   # (L, P, P, 4)
        # Mirror the reference's raw np.reshape([P*P, -1, C]) (no transpose).
        seq_img = jnp.reshape(seq[..., :3], (P * P, -1, 3))
        seq_mask = jnp.reshape(seq[..., 3:], (P * P, -1, 1))
        qdt = jnp.asarray(np.asarray(leaves, dtype=np.int32))   # (L, 3): (y, x, size)
        return seq_img, seq_mask, qdt


# ----------------------------------------------------------------------------
if __name__ == "__main__":
    key = jax.random.PRNGKey(0)
    k_img, k_mask, k_edge = jax.random.split(key, 3)

    H = W = 32
    P = 8
    L = 16  # fixed_length (must be 1 + 3k)

    img = jax.random.uniform(k_img, (H, W, 3), dtype=jnp.float32)
    mask = (jax.random.uniform(k_mask, (H, W, 1)) > 0.5).astype(jnp.float32)

    mod = SegPatchifyPallas(fixed_length=L, patch_size=P)
    seq_img, seq_mask, qdt = mod(img, mask, k_edge)
    seq_img = jax.block_until_ready(seq_img)
    seq_mask = jax.block_until_ready(seq_mask)
    qdt = jax.block_until_ready(qdt)

    # Host reference: plain numpy gather with the same index tables.
    x_np = np.asarray(mod._last_xflat)                   # (H*W, 4)
    row_np, col_np = mod._last_rowcol                    # (1, L*P*P) each
    idx_np = (row_np[0] * W + col_np[0]).reshape(L, P * P)
    seq_ref = x_np[idx_np].reshape(L, P, P, 4)           # (L, P, P, 4)
    seq_img_ref = seq_ref[..., :3].reshape(P * P, -1, 3)
    seq_mask_ref = seq_ref[..., 3:].reshape(P * P, -1, 1)

    assert seq_img.shape == (P * P, L, 3) and seq_mask.shape == (P * P, L, 1)
    np.testing.assert_allclose(np.asarray(seq_img), seq_img_ref, rtol=1e-6, atol=1e-6)
    np.testing.assert_allclose(np.asarray(seq_mask), seq_mask_ref, rtol=1e-6, atol=1e-6)

    print("KERNEL_OK")
</pallas_src>

<mosaic_0001>
module attributes {stable_mosaic.version = 11 : i64} {
  func.func @_serialize_kernel(%arg0: i32, %arg1: memref<1x1024xi32, #tpu.memory_space<vmem>>, %arg2: memref<1x1024xi32, #tpu.memory_space<vmem>>, %arg3: memref<128x32xf32, #tpu.memory_space<vmem>>, %arg4: memref<4x1024xf32, #tpu.memory_space<vmem>>) attributes {dimension_semantics = [#tpu.dimension_semantics<arbitrary>], iteration_bounds = array<i64: 1>, scalar_prefetch = 0 : i64, scratch_operands = 0 : i64, tpu.core_type = #tpu.core_type<tc>, window_params = [{pipeline_mode = #tpu.pipeline_mode<synchronous>, transform_indices = @transform_0, window_bounds = array<i64: 1, 1024>}, {pipeline_mode = #tpu.pipeline_mode<synchronous>, transform_indices = @transform_1, window_bounds = array<i64: 1, 1024>}, {pipeline_mode = #tpu.pipeline_mode<synchronous>, transform_indices = @transform_2, window_bounds = array<i64: 128, 32>}, {pipeline_mode = #tpu.pipeline_mode<synchronous>, transform_indices = @transform_3, window_bounds = array<i64: 4, 1024>}]} {
    %c0 = arith.constant 0 : index
    %c0_0 = arith.constant 0 : index
    %0 = vector.load %arg1[%c0, %c0_0] : memref<1x1024xi32, #tpu.memory_space<vmem>>, vector<1x1024xi32>
    %1 = vector.shape_cast %0 : vector<1x1024xi32> to vector<1024xi32>
    %c0_1 = arith.constant 0 : index
    %c0_2 = arith.constant 0 : index
    %2 = vector.load %arg2[%c0_1, %c0_2] : memref<1x1024xi32, #tpu.memory_space<vmem>>, vector<1x1024xi32>
    %3 = vector.shape_cast %2 : vector<1x1024xi32> to vector<1024xi32>
    %4 = tpu.iota {dimensions = array<i32: 0>} : vector<32x1024xi32>
    %5 = vector.shape_cast %3 : vector<1024xi32> to vector<1x1024xi32>
    %6 = vector.broadcast %5 : vector<1x1024xi32> to vector<32x1024xi32>
    %7 = arith.cmpi eq, %4, %6 : vector<32x1024xi32>
    %8 = arith.extui %7 : vector<32x1024xi1> to vector<32x1024xi32>
    %9 = arith.sitofp %8 : vector<32x1024xi32> to vector<32x1024xf32>
    %10 = tpu.iota {dimensions = array<i32: 0>} : vector<32x1024xi32>
    %11 = vector.shape_cast %1 : vector<1024xi32> to vector<1x1024xi32>
    %12 = vector.broadcast %11 : vector<1x1024xi32> to vector<32x1024xi32>
    %13 = arith.cmpi eq, %10, %12 : vector<32x1024xi32>
    %14 = arith.extui %13 : vector<32x1024xi1> to vector<32x1024xi32>
    %15 = arith.sitofp %14 : vector<32x1024xi32> to vector<32x1024xf32>
    %c0_3 = arith.constant 0 : index
    %c0_4 = arith.constant 0 : index
    %16 = vector.load %arg3[%c0_3, %c0_4] : memref<128x32xf32, #tpu.memory_space<vmem>>, vector<128x32xf32>
    %cst = arith.constant dense<0.000000e+00> : vector<128x1024xf32>
    %17 = tpu.matmul %16, %9, %cst {dimension_numbers = #tpu.dot_dimension_numbers<[1], [0], [0], [1], [0, 0, 1, 1], [], []>} : vector<128x32xf32>, vector<32x1024xf32>, vector<128x1024xf32> -> vector<128x1024xf32>
    %18 = vector.extract_strided_slice %17 {offsets = [0, 0], sizes = [32, 1024], strides = [1, 1]} : vector<128x1024xf32> to vector<32x1024xf32>
    %19 = arith.mulf %15, %18 : vector<32x1024xf32>
    %cst_5 = arith.constant dense<0.000000e+00> : vector<1024xf32>
    %20 = vector.multi_reduction <add>, %19, %cst_5 [0] : vector<32x1024xf32> to vector<1024xf32>
    %21 = vector.shape_cast %20 : vector<1024xf32> to vector<1x1024xf32>
    %22 = vector.extract_strided_slice %17 {offsets = [32, 0], sizes = [32, 1024], strides = [1, 1]} : vector<128x1024xf32> to vector<32x1024xf32>
    %23 = arith.mulf %15, %22 : vector<32x1024xf32>
    %cst_6 = arith.constant dense<0.000000e+00> : vector<1024xf32>
    %24 = vector.multi_reduction <add>, %23, %cst_6 [0] : vector<32x1024xf32> to vector<1024xf32>
    %25 = vector.shape_cast %24 : vector<1024xf32> to vector<1x1024xf32>
    %26 = vector.extract_strided_slice %17 {offsets = [64, 0], sizes = [32, 1024], strides = [1, 1]} : vector<128x1024xf32> to vector<32x1024xf32>
    %27 = arith.mulf %15, %26 : vector<32x1024xf32>
    %cst_7 = arith.constant dense<0.000000e+00> : vector<1024xf32>
    %28 = vector.multi_reduction <add>, %27, %cst_7 [0] : vector<32x1024xf32> to vector<1024xf32>
    %29 = vector.shape_cast %28 : vector<1024xf32> to vector<1x1024xf32>
    %30 = vector.extract_strided_slice %17 {offsets = [96, 0], sizes = [32, 1024], strides = [1, 1]} : vector<128x1024xf32> to vector<32x1024xf32>
    %31 = arith.mulf %15, %30 : vector<32x1024xf32>
    %cst_8 = arith.constant dense<0.000000e+00> : vector<1024xf32>
    %32 = vector.multi_reduction <add>, %31, %cst_8 [0] : vector<32x1024xf32> to vector<1024xf32>
    %33 = vector.shape_cast %32 : vector<1024xf32> to vector<1x1024xf32>
    %34 = tpu.concatenate %21, %25, %29, %33 in 0 : vector<1x1024xf32>, vector<1x1024xf32>, vector<1x1024xf32>, vector<1x1024xf32> -> vector<4x1024xf32>
    %c0_9 = arith.constant 0 : index
    %c0_10 = arith.constant 0 : index
    %35 = vector.load %arg4[%c0_9, %c0_10] : memref<4x1024xf32, #tpu.memory_space<vmem>>, vector<4x1024xf32>
    tpu.vector_store %arg4[%c0_9, %c0_10], %34 {strides = array<i32>} : memref<4x1024xf32, #tpu.memory_space<vmem>>, vector<4x1024xf32>,
    return
  }
  func.func @transform_0(%arg0: i32) -> (i32, i32) {
    %c0_i32 = arith.constant 0 : i32
    %c0_i32_0 = arith.constant 0 : i32
    %c0_i32_1 = arith.constant 0 : i32
    return %c0_i32, %c0_i32_0 : i32, i32
  }
  func.func @transform_1(%arg0: i32) -> (i32, i32) {
    %c0_i32 = arith.constant 0 : i32
    %c0_i32_0 = arith.constant 0 : i32
    %c0_i32_1 = arith.constant 0 : i32
    return %c0_i32, %c0_i32_0 : i32, i32
  }
  func.func @transform_2(%arg0: i32) -> (i32, i32) {
    %c0_i32 = arith.constant 0 : i32
    %c0_i32_0 = arith.constant 0 : i32
    %c0_i32_1 = arith.constant 0 : i32
    return %c0_i32, %c0_i32_0 : i32, i32
  }
  func.func @transform_3(%arg0: i32) -> (i32, i32) {
    %c0_i32 = arith.constant 0 : i32
    %c0_i32_0 = arith.constant 0 : i32
    %c0_i32_1 = arith.constant 0 : i32
    return %c0_i32, %c0_i32_0 : i32, i32
  }
}

</mosaic_0001>

<llo_original>
// kernel: tpu_custom_call.1
$region0: #{tpu_custom_call.1}
  #allocation0 [shape = 'u32[]', space=smem, size = 0x4, offset = 0x4, fixed_abs, tag = 'smem constant byte address 0x4 - core index']
  #allocation1 [shape = 'u32[72,128]{1,0:T(1,128)}', space=vmem, size = 0x9000, scoped, tag = 'internal scratch']
  %s0 = inlined_call_operand.vmem [shape: s32[1,1024], index: 0, kind: input, shape index: {}]
  %s1 = inlined_call_operand.vmem [shape: s32[1,1024], index: 1, kind: input, shape index: {}]
  %s2 = inlined_call_operand.vmem [shape: f32[128,32], index: 2, kind: input, shape index: {}]
  %s3 = inlined_call_operand.hbm [shape: f32[4,1024], index: 3, kind: output, shape index: {}]
  %s4 = sld [smem:[#allocation0]]
  $region22: #{tpu_custom_call.1} parent=0
    _
  %s6 = ssub.s32 1, %s4
  %s7 = scalar_select 0, %s6, %s4
  $region1: #{tpu_custom_call.1} parent=0
    #allocation2 [shape = 'u8[16384]{0}', space=vmem, size = 0x4000, scoped, tag = 'output window, operand 0, single buffered']
    #allocation3 [shape = 's32[1]{0}', space=sflag, size = 0x4, scoped, tag = 'scoped memory for tpu_custom_call.1']
    %8 = vsyncpa [#allocation3], 0
    // Predicated region
    $region2: #{tpu_custom_call.1} parent=1 // pred_check
      _
    $region3: #{tpu_custom_call.1} parent=1 // pred_check_branch
      %10 = sbr.rel (0) target = $region5
    $region4: #{tpu_custom_call.1} parent=1 // pred_region
      _
    $region5: #{tpu_custom_call.1} parent=1 // pred_fallthru
      _
    // Predicated region
    $region6: #{tpu_custom_call.1} parent=1 // pred_check
      _
    $region7: #{tpu_custom_call.1} parent=1 // pred_check_branch
      %12 = sbr.rel (0) target = $region9
    $region8: #{tpu_custom_call.1} parent=1 // pred_region
      _
    $region9: #{tpu_custom_call.1} parent=1 // pred_fallthru
      _
    // Predicated region
    $region10: #{tpu_custom_call.1} parent=1 // pred_check
      _
    $region11: #{tpu_custom_call.1} parent=1 // pred_check_branch
      %14 = sbr.rel (0) target = $region13
    $region12: #{tpu_custom_call.1} parent=1 // pred_region
      _
    $region13: #{tpu_custom_call.1} parent=1 // pred_fallthru
      _
    %v15 = vld [vmem:[%s0] sm:$0xff]
    %v16 = vld [vmem:[%s1] sm:$0xff]
    %v17 = vlaneseq
    %v18 = vshrl.u32 %v17, 7
    %v19 = vadd.s32 %v18, 8
    %v20 = vadd.s32 %v18, 16
    %v21 = vadd.s32 %v18, 24
    %v22 = vperm.slane %v16, 0
    %v23 = vperm.slane %v16, 1
    %v24 = vperm.slane %v16, 2
    %v25 = vperm.slane %v16, 3
    %v26 = vperm.slane %v16, 4
    %v27 = vperm.slane %v16, 5
    %v28 = vperm.slane %v16, 6
    %v29 = vperm.slane %v16, 7
    %vm30 = vcmp.eq.s32.totalorder %v18, %v22
    %vm31 = vcmp.eq.s32.totalorder %v18, %v23
    %vm32 = vcmp.eq.s32.totalorder %v18, %v24
    %vm33 = vcmp.eq.s32.totalorder %v18, %v25
    %vm34 = vcmp.eq.s32.totalorder %v18, %v26
    %vm35 = vcmp.eq.s32.totalorder %v18, %v27
    %vm36 = vcmp.eq.s32.totalorder %v18, %v28
    %vm37 = vcmp.eq.s32.totalorder %v18, %v29
    %vm38 = vcmp.eq.s32.totalorder %v19, %v22
    %vm39 = vcmp.eq.s32.totalorder %v19, %v23
    %vm40 = vcmp.eq.s32.totalorder %v19, %v24
    %vm41 = vcmp.eq.s32.totalorder %v19, %v25
    %vm42 = vcmp.eq.s32.totalorder %v19, %v26
    %vm43 = vcmp.eq.s32.totalorder %v19, %v27
    %vm44 = vcmp.eq.s32.totalorder %v19, %v28
    %vm45 = vcmp.eq.s32.totalorder %v19, %v29
    %vm46 = vcmp.eq.s32.totalorder %v20, %v22
    %vm47 = vcmp.eq.s32.totalorder %v20, %v23
    %vm48 = vcmp.eq.s32.totalorder %v20, %v24
    %vm49 = vcmp.eq.s32.totalorder %v20, %v25
    %vm50 = vcmp.eq.s32.totalorder %v20, %v26
    %vm51 = vcmp.eq.s32.totalorder %v20, %v27
    %vm52 = vcmp.eq.s32.totalorder %v20, %v28
    %vm53 = vcmp.eq.s32.totalorder %v20, %v29
    %vm54 = vcmp.eq.s32.totalorder %v21, %v22
    %vm55 = vcmp.eq.s32.totalorder %v21, %v23
    %vm56 = vcmp.eq.s32.totalorder %v21, %v24
    %vm57 = vcmp.eq.s32.totalorder %v21, %v25
    %vm58 = vcmp.eq.s32.totalorder %v21, %v26
    %vm59 = vcmp.eq.s32.totalorder %v21, %v27
    %vm60 = vcmp.eq.s32.totalorder %v21, %v28
    %vm61 = vcmp.eq.s32.totalorder %v21, %v29
    %v62 = vsel %vm30, 1, 0
    %v63 = vsel %vm31, 1, 0
    %v64 = vsel %vm32, 1, 0
    %v65 = vsel %vm33, 1, 0
    %v66 = vsel %vm34, 1, 0
    %v67 = vsel %vm35, 1, 0
    %v68 = vsel %vm36, 1, 0
    %v69 = vsel %vm37, 1, 0
    %v70 = vsel %vm38, 1, 0
    %v71 = vsel %vm39, 1, 0
    %v72 = vsel %vm40, 1, 0
    %v73 = vsel %vm41, 1, 0
    %v74 = vsel %vm42, 1, 0
    %v75 = vsel %vm43, 1, 0
    %v76 = vsel %vm44, 1, 0
    %v77 = vsel %vm45, 1, 0
    %v78 = vsel %vm46, 1, 0
    %v79 = vsel %vm47, 1, 0
    %v80 = vsel %vm48, 1, 0
    %v81 = vsel %vm49, 1, 0
    %v82 = vsel %vm50, 1, 0
    %v83 = vsel %vm51, 1, 0
    %v84 = vsel %vm52, 1, 0
    %v85 = vsel %vm53, 1, 0
    %v86 = vsel %vm54, 1, 0
    %v87 = vsel %vm55, 1, 0
    %v88 = vsel %vm56, 1, 0
    %v89 = vsel %vm57, 1, 0
    %v90 = vsel %vm58, 1, 0
    %v91 = vsel %vm59, 1, 0
    %v92 = vsel %vm60, 1, 0
    %v93 = vsel %vm61, 1, 0
    %v94 = vcvt.s32.f32 %v62
    %v95 = vcvt.s32.f32 %v63
    %v96 = vcvt.s32.f32 %v64
    %v97 = vcvt.s32.f32 %v65
    %v98 = vcvt.s32.f32 %v66
    %v99 = vcvt.s32.f32 %v67
    %v100 = vcvt.s32.f32 %v68
    %v101 = vcvt.s32.f32 %v69
    %v102 = vcvt.s32.f32 %v70
    %v103 = vcvt.s32.f32 %v71
    %v104 = vcvt.s32.f32 %v72
    %v105 = vcvt.s32.f32 %v73
    %v106 = vcvt.s32.f32 %v74
    %v107 = vcvt.s32.f32 %v75
    %v108 = vcvt.s32.f32 %v76
    %v109 = vcvt.s32.f32 %v77
    %v110 = vcvt.s32.f32 %v78
    %v111 = vcvt.s32.f32 %v79
    %v112 = vcvt.s32.f32 %v80
    %v113 = vcvt.s32.f32 %v81
    %v114 = vcvt.s32.f32 %v82
    %v115 = vcvt.s32.f32 %v83
    %v116 = vcvt.s32.f32 %v84
    %v117 = vcvt.s32.f32 %v85
    %v118 = vcvt.s32.f32 %v86
    %v119 = vcvt.s32.f32 %v87
    %v120 = vcvt.s32.f32 %v88
    %v121 = vcvt.s32.f32 %v89
    %v122 = vcvt.s32.f32 %v90
    %v123 = vcvt.s32.f32 %v91
    %v124 = vcvt.s32.f32 %v92
    %v125 = vcvt.s32.f32 %v93
    %v126 = vperm.slane %v15, 0
    %v127 = vperm.slane %v15, 1
    %v128 = vperm.slane %v15, 2
    %v129 = vperm.slane %v15, 3
    %v130 = vperm.slane %v15, 4
    %v131 = vperm.slane %v15, 5
    %v132 = vperm.slane %v15, 6
    %v133 = vperm.slane %v15, 7
    %vm134 = vcmp.eq.s32.totalorder %v18, %v126
    %vm135 = vcmp.eq.s32.totalorder %v18, %v127
    %vm136 = vcmp.eq.s32.totalorder %v18, %v128
    %vm137 = vcmp.eq.s32.totalorder %v18, %v129
    %vm138 = vcmp.eq.s32.totalorder %v18, %v130
    %vm139 = vcmp.eq.s32.totalorder %v18, %v131
    %vm140 = vcmp.eq.s32.totalorder %v18, %v132
    %vm141 = vcmp.eq.s32.totalorder %v18, %v133
    %vm142 = vcmp.eq.s32.totalorder %v19, %v126
    %vm143 = vcmp.eq.s32.totalorder %v19, %v127
    %vm144 = vcmp.eq.s32.totalorder %v19, %v128
    %vm145 = vcmp.eq.s32.totalorder %v19, %v129
    %vm146 = vcmp.eq.s32.totalorder %v19, %v130
    %vm147 = vcmp.eq.s32.totalorder %v19, %v131
    %vm148 = vcmp.eq.s32.totalorder %v19, %v132
    %vm149 = vcmp.eq.s32.totalorder %v19, %v133
    %vm150 = vcmp.eq.s32.totalorder %v20, %v126
    %vm151 = vcmp.eq.s32.totalorder %v20, %v127
    %vm152 = vcmp.eq.s32.totalorder %v20, %v128
    %vm153 = vcmp.eq.s32.totalorder %v20, %v129
    %vm154 = vcmp.eq.s32.totalorder %v20, %v130
    %vm155 = vcmp.eq.s32.totalorder %v20, %v131
    %vm156 = vcmp.eq.s32.totalorder %v20, %v132
    %vm157 = vcmp.eq.s32.totalorder %v20, %v133
    %vm158 = vcmp.eq.s32.totalorder %v21, %v126
    %vm159 = vcmp.eq.s32.totalorder %v21, %v127
    %vm160 = vcmp.eq.s32.totalorder %v21, %v128
    %vm161 = vcmp.eq.s32.totalorder %v21, %v129
    %vm162 = vcmp.eq.s32.totalorder %v21, %v130
    %vm163 = vcmp.eq.s32.totalorder %v21, %v131
    %vm164 = vcmp.eq.s32.totalorder %v21, %v132
    %vm165 = vcmp.eq.s32.totalorder %v21, %v133
    %v166 = vsel %vm134, 1, 0
    %v167 = vsel %vm135, 1, 0
    %v168 = vsel %vm136, 1, 0
    %v169 = vsel %vm137, 1, 0
    %v170 = vsel %vm138, 1, 0
    %v171 = vsel %vm139, 1, 0
    %v172 = vsel %vm140, 1, 0
    %v173 = vsel %vm141, 1, 0
    %v174 = vsel %vm142, 1, 0
    %v175 = vsel %vm143, 1, 0
    %v176 = vsel %vm144, 1, 0
    %v177 = vsel %vm145, 1, 0
    %v178 = vsel %vm146, 1, 0
    %v179 = vsel %vm147, 1, 0
    %v180 = vsel %vm148, 1, 0
    %v181 = vsel %vm149, 1, 0
    %v182 = vsel %vm150, 1, 0
    %v183 = vsel %vm151, 1, 0
    %v184 = vsel %vm152, 1, 0
    %v185 = vsel %vm153, 1, 0
    %v186 = vsel %vm154, 1, 0
    %v187 = vsel %vm155, 1, 0
    %v188 = vsel %vm156, 1, 0
    %v189 = vsel %vm157, 1, 0
    %v190 = vsel %vm158, 1, 0
    %v191 = vsel %vm159, 1, 0
    %v192 = vsel %vm160, 1, 0
    %v193 = vsel %vm161, 1, 0
    %v194 = vsel %vm162, 1, 0
    %v195 = vsel %vm163, 1, 0
    %v196 = vsel %vm164, 1, 0
    %v197 = vsel %vm165, 1, 0
    %v198 = vcvt.s32.f32 %v166
    %v199 = vcvt.s32.f32 %v167
    %v200 = vcvt.s32.f32 %v168
    %v201 = vcvt.s32.f32 %v169
    %v202 = vcvt.s32.f32 %v170
    %v203 = vcvt.s32.f32 %v171
    %v204 = vcvt.s32.f32 %v172
    %v205 = vcvt.s32.f32 %v173
    %v206 = vcvt.s32.f32 %v174
    %v207 = vcvt.s32.f32 %v175
    %v208 = vcvt.s32.f32 %v176
    %v209 = vcvt.s32.f32 %v177
    %v210 = vcvt.s32.f32 %v178
    %v211 = vcvt.s32.f32 %v179
    %v212 = vcvt.s32.f32 %v180
    %v213 = vcvt.s32.f32 %v181
    %v214 = vcvt.s32.f32 %v182
    %v215 = vcvt.s32.f32 %v183
    %v216 = vcvt.s32.f32 %v184
    %v217 = vcvt.s32.f32 %v185
    %v218 = vcvt.s32.f32 %v186
    %v219 = vcvt.s32.f32 %v187
    %v220 = vcvt.s32.f32 %v188
    %v221 = vcvt.s32.f32 %v189
    %v222 = vcvt.s32.f32 %v190
    %v223 = vcvt.s32.f32 %v191
    %v224 = vcvt.s32.f32 %v192
    %v225 = vcvt.s32.f32 %v193
    %v226 = vcvt.s32.f32 %v194
    %v227 = vcvt.s32.f32 %v195
    %v228 = vcvt.s32.f32 %v196
    %v229 = vcvt.s32.f32 %v197
    %v230 = vld [vmem:[%s2] sm:$0xff]
    %v231 = vld [vmem:[%s2 + $0x8] sm:$0xff]
    %v232 = vld [vmem:[%s2 + $0x10] sm:$0xff]
    %v233 = vld [vmem:[%s2 + $0x18] sm:$0xff]
    %v234 = vld [vmem:[%s2 + $0x20] sm:$0xff]
    %v235 = vld [vmem:[%s2 + $0x28] sm:$0xff]
    %v236 = vld [vmem:[%s2 + $0x30] sm:$0xff]
    %v237 = vld [vmem:[%s2 + $0x38] sm:$0xff]
    %v238 = vld [vmem:[%s2 + $0x40] sm:$0xff]
    %v239 = vld [vmem:[%s2 + $0x48] sm:$0xff]
    %v240 = vld [vmem:[%s2 + $0x50] sm:$0xff]
    %v241 = vld [vmem:[%s2 + $0x58] sm:$0xff]
    %v242 = vld [vmem:[%s2 + $0x60] sm:$0xff]
    %v243 = vld [vmem:[%s2 + $0x68] sm:$0xff]
    %v244 = vld [vmem:[%s2 + $0x70] sm:$0xff]
    %v245 = vld [vmem:[%s2 + $0x78] sm:$0xff]
    %vm246 = vcmask 261120
    %v248 = vsel %vm246, %v230, 0
    %v251 = vsel %vm246, %v231, 0
    %v254 = vsel %vm246, %v232, 0
    %v257 = vsel %vm246, %v233, 0
    %v260 = vsel %vm246, %v234, 0
    %v263 = vsel %vm246, %v235, 0
    %v266 = vsel %vm246, %v236, 0
    %v269 = vsel %vm246, %v237, 0
    %v272 = vsel %vm246, %v238, 0
    %v275 = vsel %vm246, %v239, 0
    %v278 = vsel %vm246, %v240, 0
    %v281 = vsel %vm246, %v241, 0
    %v284 = vsel %vm246, %v242, 0
    %v287 = vsel %vm246, %v243, 0
    %v290 = vsel %vm246, %v244, 0
    %v293 = vsel %vm246, %v245, 0
    %295 = vmatpush.msra.mxu0 0.0
    %296 = vmatpush.msra.mxu0 0.0
    %297 = vmatpush.msra.mxu0 0.0
    %298 = vmatpush.msra.mxu0 0.0
    %299 = vmatpush.msra.mxu0 0.0
    %300 = vmatpush.msra.mxu0 0.0
    %301 = vmatpush.msra.mxu0 0.0
    %302 = vmatpush.msra.mxu0 0.0
    %303 = vmatpush.msra.mxu0 0.0
    %304 = vmatpush.msra.mxu0 0.0
    %305 = vmatpush.msra.mxu0 0.0
    %306 = vmatpush.msra.mxu0 0.0
    %307 = vmatpush.msra.mxu0 %v118
    %308 = vmatpush.msra.mxu0 %v110
    %309 = vmatpush.msra.mxu0 %v102
    %310 = vmatpush.msra.mxu0 %v94
    %311 = vmatmul.f32.gmra.mxu0 %v248
    %v312 = vpop.f32.mrf.mxu0
    %v313 = vadd.f32 0.0, %v312
    %314 = vmatmul.f32.gmra.mxu0 %v251
    %v315 = vpop.f32.mrf.mxu0
    %v316 = vadd.f32 0.0, %v315
    %317 = vmatmul.f32.gmra.mxu0 %v254
    %v318 = vpop.f32.mrf.mxu0
    %v319 = vadd.f32 0.0, %v318
    %320 = vmatmul.f32.gmra.mxu0 %v257
    %v321 = vpop.f32.mrf.mxu0
    %v322 = vadd.f32 0.0, %v321
    %323 = vmatmul.f32.gmra.mxu0 %v260
    %v324 = vpop.f32.mrf.mxu0
    %v325 = vadd.f32 0.0, %v324
    %326 = vmatmul.f32.gmra.mxu0 %v263
    %v327 = vpop.f32.mrf.mxu0
    %v328 = vadd.f32 0.0, %v327
    %329 = vmatmul.f32.gmra.mxu0 %v266
    %v330 = vpop.f32.mrf.mxu0
    %v331 = vadd.f32 0.0, %v330
    %332 = vmatmul.f32.gmra.mxu0 %v269
    %v333 = vpop.f32.mrf.mxu0
    %v334 = vadd.f32 0.0, %v333
    %335 = vmatmul.f32.gmra.mxu0 %v272
    %v336 = vpop.f32.mrf.mxu0
    %v337 = vadd.f32 0.0, %v336
    %338 = vmatmul.f32.gmra.mxu0 %v275
    %v339 = vpop.f32.mrf.mxu0
    %v340 = vadd.f32 0.0, %v339
    %341 = vmatmul.f32.gmra.mxu0 %v278
    %v342 = vpop.f32.mrf.mxu0
    %v343 = vadd.f32 0.0, %v342
    %344 = vmatmul.f32.gmra.mxu0 %v281
    %v345 = vpop.f32.mrf.mxu0
    %v346 = vadd.f32 0.0, %v345
    %347 = vmatmul.f32.gmra.mxu0 %v284
    %v348 = vpop.f32.mrf.mxu0
    %v349 = vadd.f32 0.0, %v348
    %350 = vmatmul.f32.gmra.mxu0 %v287
    %v351 = vpop.f32.mrf.mxu0
    %v352 = vadd.f32 0.0, %v351
    %353 = vmatmul.f32.gmra.mxu0 %v290
    %v354 = vpop.f32.mrf.mxu0
    %v355 = vadd.f32 0.0, %v354
    %356 = vmatmul.f32.gmra.mxu0 %v293
    %v357 = vpop.f32.mrf.mxu0
    %v358 = vadd.f32 0.0, %v357
    %359 = vdwg.mxu0
    %360 = vmatpush.msra.mxu0 0.0
    %361 = vmatpush.msra.mxu0 0.0
    %362 = vmatpush.msra.mxu0 0.0
    %363 = vmatpush.msra.mxu0 0.0
    %364 = vmatpush.msra.mxu0 0.0
    %365 = vmatpush.msra.mxu0 0.0
    %366 = vmatpush.msra.mxu0 0.0
    %367 = vmatpush.msra.mxu0 0.0
    %368 = vmatpush.msra.mxu0 0.0
    %369 = vmatpush.msra.mxu0 0.0
    %370 = vmatpush.msra.mxu0 0.0
    %371 = vmatpush.msra.mxu0 0.0
    %372 = vmatpush.msra.mxu0 %v119
    %373 = vmatpush.msra.mxu0 %v111
    %374 = vmatpush.msra.mxu0 %v103
    %375 = vmatpush.msra.mxu0 %v95
    %376 = vmatmul.f32.gmra.mxu0 %v248
    %v377 = vpop.f32.mrf.mxu0
    %v378 = vadd.f32 0.0, %v377
    %379 = vmatmul.f32.gmra.mxu0 %v251
    %v380 = vpop.f32.mrf.mxu0
    %v381 = vadd.f32 0.0, %v380
    %382 = vmatmul.f32.gmra.mxu0 %v254
    %v383 = vpop.f32.mrf.mxu0
    %v384 = vadd.f32 0.0, %v383
    %385 = vmatmul.f32.gmra.mxu0 %v257
    %v386 = vpop.f32.mrf.mxu0
    %v387 = vadd.f32 0.0, %v386
    %388 = vmatmul.f32.gmra.mxu0 %v260
    %v389 = vpop.f32.mrf.mxu0
    %v390 = vadd.f32 0.0, %v389
    %391 = vmatmul.f32.gmra.mxu0 %v263
    %v392 = vpop.f32.mrf.mxu0
    %v393 = vadd.f32 0.0, %v392
    %394 = vmatmul.f32.gmra.mxu0 %v266
    %v395 = vpop.f32.mrf.mxu0
    %v396 = vadd.f32 0.0, %v395
    %397 = vmatmul.f32.gmra.mxu0 %v269
    %v398 = vpop.f32.mrf.mxu0
    %v399 = vadd.f32 0.0, %v398
    %400 = vmatmul.f32.gmra.mxu0 %v272
    %v401 = vpop.f32.mrf.mxu0
    %v402 = vadd.f32 0.0, %v401
    %403 = vmatmul.f32.gmra.mxu0 %v275
    %v404 = vpop.f32.mrf.mxu0
    %v405 = vadd.f32 0.0, %v404
    %406 = vmatmul.f32.gmra.mxu0 %v278
    %v407 = vpop.f32.mrf.mxu0
    %v408 = vadd.f32 0.0, %v407
    %409 = vmatmul.f32.gmra.mxu0 %v281
    %v410 = vpop.f32.mrf.mxu0
    %v411 = vadd.f32 0.0, %v410
    %412 = vmatmul.f32.gmra.mxu0 %v284
    %v413 = vpop.f32.mrf.mxu0
    %v414 = vadd.f32 0.0, %v413
    %415 = vmatmul.f32.gmra.mxu0 %v287
    %v416 = vpop.f32.mrf.mxu0
    %v417 = vadd.f32 0.0, %v416
    %418 = vmatmul.f32.gmra.mxu0 %v290
    %v419 = vpop.f32.mrf.mxu0
    %v420 = vadd.f32 0.0, %v419
    %421 = vmatmul.f32.gmra.mxu0 %v293
    %v422 = vpop.f32.mrf.mxu0
    %v423 = vadd.f32 0.0, %v422
    %424 = vdwg.mxu0
    %425 = vmatpush.msra.mxu0 0.0
    %426 = vmatpush.msra.mxu0 0.0
    %427 = vmatpush.msra.mxu0 0.0
    %428 = vmatpush.msra.mxu0 0.0
    %429 = vmatpush.msra.mxu0 0.0
    %430 = vmatpush.msra.mxu0 0.0
    %431 = vmatpush.msra.mxu0 0.0
    %432 = vmatpush.msra.mxu0 0.0
    %433 = vmatpush.msra.mxu0 0.0
    %434 = vmatpush.msra.mxu0 0.0
    %435 = vmatpush.msra.mxu0 0.0
    %436 = vmatpush.msra.mxu0 0.0
    %437 = vmatpush.msra.mxu0 %v120
    %438 = vmatpush.msra.mxu0 %v112
    %439 = vmatpush.msra.mxu0 %v104
    %440 = vmatpush.msra.mxu0 %v96
    %441 = vmatmul.f32.gmra.mxu0 %v248
    %v442 = vpop.f32.mrf.mxu0
    %v443 = vadd.f32 0.0, %v442
    %444 = vmatmul.f32.gmra.mxu0 %v251
    %v445 = vpop.f32.mrf.mxu0
    %v446 = vadd.f32 0.0, %v445
    %447 = vmatmul.f32.gmra.mxu0 %v254
    %v448 = vpop.f32.mrf.mxu0
    %v449 = vadd.f32 0.0, %v448
    %450 = vmatmul.f32.gmra.mxu0 %v257
    %v451 = vpop.f32.mrf.mxu0
    %v452 = vadd.f32 0.0, %v451
    %453 = vmatmul.f32.gmra.mxu0 %v260
    %v454 = vpop.f32.mrf.mxu0
    %v455 = vadd.f32 0.0, %v454
    %456 = vmatmul.f32.gmra.mxu0 %v263
    %v457 = vpop.f32.mrf.mxu0
    %v458 = vadd.f32 0.0, %v457
    %459 = vmatmul.f32.gmra.mxu0 %v266
    %v460 = vpop.f32.mrf.mxu0
    %v461 = vadd.f32 0.0, %v460
    %462 = vmatmul.f32.gmra.mxu0 %v269
    %v463 = vpop.f32.mrf.mxu0
    %v464 = vadd.f32 0.0, %v463
    %465 = vmatmul.f32.gmra.mxu0 %v272
    %v466 = vpop.f32.mrf.mxu0
    %v467 = vadd.f32 0.0, %v466
    %468 = vmatmul.f32.gmra.mxu0 %v275
    %v469 = vpop.f32.mrf.mxu0
    %v470 = vadd.f32 0.0, %v469
    %471 = vmatmul.f32.gmra.mxu0 %v278
    %v472 = vpop.f32.mrf.mxu0
    %v473 = vadd.f32 0.0, %v472
    %474 = vmatmul.f32.gmra.mxu0 %v281
    %v475 = vpop.f32.mrf.mxu0
    %v476 = vadd.f32 0.0, %v475
    %477 = vmatmul.f32.gmra.mxu0 %v284
    %v478 = vpop.f32.mrf.mxu0
    %v479 = vadd.f32 0.0, %v478
    %480 = vmatmul.f32.gmra.mxu0 %v287
    %v481 = vpop.f32.mrf.mxu0
    %v482 = vadd.f32 0.0, %v481
    %483 = vmatmul.f32.gmra.mxu0 %v290
    %v484 = vpop.f32.mrf.mxu0
    %v485 = vadd.f32 0.0, %v484
    %486 = vmatmul.f32.gmra.mxu0 %v293
    %v487 = vpop.f32.mrf.mxu0
    %v488 = vadd.f32 0.0, %v487
    %489 = vdwg.mxu0
    %490 = vmatpush.msra.mxu0 0.0
    %491 = vmatpush.msra.mxu0 0.0
    %492 = vmatpush.msra.mxu0 0.0
    %493 = vmatpush.msra.mxu0 0.0
    %494 = vmatpush.msra.mxu0 0.0
    %495 = vmatpush.msra.mxu0 0.0
    %496 = vmatpush.msra.mxu0 0.0
    %497 = vmatpush.msra.mxu0 0.0
    %498 = vmatpush.msra.mxu0 0.0
    %499 = vmatpush.msra.mxu0 0.0
    %500 = vmatpush.msra.mxu0 0.0
    %501 = vmatpush.msra.mxu0 0.0
    %502 = vmatpush.msra.mxu0 %v121
    %503 = vmatpush.msra.mxu0 %v113
    %504 = vmatpush.msra.mxu0 %v105
    %505 = vmatpush.msra.mxu0 %v97
    %506 = vmatmul.f32.gmra.mxu0 %v248
    %v507 = vpop.f32.mrf.mxu0
    %v508 = vadd.f32 0.0, %v507
    %509 = vmatmul.f32.gmra.mxu0 %v251
    %v510 = vpop.f32.mrf.mxu0
    %v511 = vadd.f32 0.0, %v510
    %512 = vmatmul.f32.gmra.mxu0 %v254
    %v513 = vpop.f32.mrf.mxu0
    %v514 = vadd.f32 0.0, %v513
    %515 = vmatmul.f32.gmra.mxu0 %v257
    %v516 = vpop.f32.mrf.mxu0
    %v517 = vadd.f32 0.0, %v516
    %518 = vmatmul.f32.gmra.mxu0 %v260
    %v519 = vpop.f32.mrf.mxu0
    %v520 = vadd.f32 0.0, %v519
    %521 = vmatmul.f32.gmra.mxu0 %v263
    %v522 = vpop.f32.mrf.mxu0
    %v523 = vadd.f32 0.0, %v522
    %524 = vmatmul.f32.gmra.mxu0 %v266
    %v525 = vpop.f32.mrf.mxu0
    %v526 = vadd.f32 0.0, %v525
    %527 = vmatmul.f32.gmra.mxu0 %v269
    %v528 = vpop.f32.mrf.mxu0
    %v529 = vadd.f32 0.0, %v528
    %530 = vmatmul.f32.gmra.mxu0 %v272
    %v531 = vpop.f32.mrf.mxu0
    %v532 = vadd.f32 0.0, %v531
    %533 = vmatmul.f32.gmra.mxu0 %v275
    %v534 = vpop.f32.mrf.mxu0
    %v535 = vadd.f32 0.0, %v534
    %536 = vmatmul.f32.gmra.mxu0 %v278
    %v537 = vpop.f32.mrf.mxu0
    %v538 = vadd.f32 0.0, %v537
    %539 = vmatmul.f32.gmra.mxu0 %v281
    %v540 = vpop.f32.mrf.mxu0
    %v541 = vadd.f32 0.0, %v540
    %542 = vmatmul.f32.gmra.mxu0 %v284
    %v543 = vpop.f32.mrf.mxu0
    %v544 = vadd.f32 0.0, %v543
    %545 = vmatmul.f32.gmra.mxu0 %v287
    %v546 = vpop.f32.mrf.mxu0
    %v547 = vadd.f32 0.0, %v546
    %548 = vmatmul.f32.gmra.mxu0 %v290
    %v549 = vpop.f32.mrf.mxu0
    %v550 = vadd.f32 0.0, %v549
    %551 = vmatmul.f32.gmra.mxu0 %v293
    %v552 = vpop.f32.mrf.mxu0
    %v553 = vadd.f32 0.0, %v552
    %554 = vdwg.mxu0
    %555 = vmatpush.msra.mxu0 0.0
    %556 = vmatpush.msra.mxu0 0.0
    %557 = vmatpush.msra.mxu0 0.0
    %558 = vmatpush.msra.mxu0 0.0
    %559 = vmatpush.msra.mxu0 0.0
    %560 = vmatpush.msra.mxu0 0.0
    %561 = vmatpush.msra.mxu0 0.0
    %562 = vmatpush.msra.mxu0 0.0
    %563 = vmatpush.msra.mxu0 0.0
    %564 = vmatpush.msra.mxu0 0.0
    %565 = vmatpush.msra.mxu0 0.0
    %566 = vmatpush.msra.mxu0 0.0
    %567 = vmatpush.msra.mxu0 %v122
    %568 = vmatpush.msra.mxu0 %v114
    %569 = vmatpush.msra.mxu0 %v106
    %570 = vmatpush.msra.mxu0 %v98
    %571 = vmatmul.f32.gmra.mxu0 %v248
    %v572 = vpop.f32.mrf.mxu0
    %v573 = vadd.f32 0.0, %v572
    %574 = vmatmul.f32.gmra.mxu0 %v251
    %v575 = vpop.f32.mrf.mxu0
    %v576 = vadd.f32 0.0, %v575
    %577 = vmatmul.f32.gmra.mxu0 %v254
    %v578 = vpop.f32.mrf.mxu0
    %v579 = vadd.f32 0.0, %v578
    %580 = vmatmul.f32.gmra.mxu0 %v257
    %v581 = vpop.f32.mrf.mxu0
    %v582 = vadd.f32 0.0, %v581
    %583 = vmatmul.f32.gmra.mxu0 %v260
    %v584 = vpop.f32.mrf.mxu0
    %v585 = vadd.f32 0.0, %v584
    %586 = vmatmul.f32.gmra.mxu0 %v263
    %v587 = vpop.f32.mrf.mxu0
    %v588 = vadd.f32 0.0, %v587
    %589 = vmatmul.f32.gmra.mxu0 %v266
    %v590 = vpop.f32.mrf.mxu0
    %v591 = vadd.f32 0.0, %v590
    %592 = vmatmul.f32.gmra.mxu0 %v269
    %v593 = vpop.f32.mrf.mxu0
    %v594 = vadd.f32 0.0, %v593
    %595 = vmatmul.f32.gmra.mxu0 %v272
    %v596 = vpop.f32.mrf.mxu0
    %v597 = vadd.f32 0.0, %v596
    %598 = vmatmul.f32.gmra.mxu0 %v275
    %v599 = vpop.f32.mrf.mxu0
    %v600 = vadd.f32 0.0, %v599
    %601 = vmatmul.f32.gmra.mxu0 %v278
    %v602 = vpop.f32.mrf.mxu0
    %v603 = vadd.f32 0.0, %v602
    %604 = vmatmul.f32.gmra.mxu0 %v281
    %v605 = vpop.f32.mrf.mxu0
    %v606 = vadd.f32 0.0, %v605
    %607 = vmatmul.f32.gmra.mxu0 %v284
    %v608 = vpop.f32.mrf.mxu0
    %v609 = vadd.f32 0.0, %v608
    %610 = vmatmul.f32.gmra.mxu0 %v287
    %v611 = vpop.f32.mrf.mxu0
    %v612 = vadd.f32 0.0, %v611
    %613 = vmatmul.f32.gmra.mxu0 %v290
    %v614 = vpop.f32.mrf.mxu0
    %v615 = vadd.f32 0.0, %v614
    %616 = vmatmul.f32.gmra.mxu0 %v293
    %v617 = vpop.f32.mrf.mxu0
    %v618 = vadd.f32 0.0, %v617
    %619 = vdwg.mxu0
    %620 = vmatpush.msra.mxu0 0.0
    %621 = vmatpush.msra.mxu0 0.0
    %622 = vmatpush.msra.mxu0 0.0
    %623 = vmatpush.msra.mxu0 0.0
    %624 = vmatpush.msra.mxu0 0.0
    %625 = vmatpush.msra.mxu0 0.0
    %626 = vmatpush.msra.mxu0 0.0
    %627 = vmatpush.msra.mxu0 0.0
    %628 = vmatpush.msra.mxu0 0.0
    %629 = vmatpush.msra.mxu0 0.0
    %630 = vmatpush.msra.mxu0 0.0
    %631 = vmatpush.msra.mxu0 0.0
    %632 = vmatpush.msra.mxu0 %v123
    %633 = vmatpush.msra.mxu0 %v115
    %634 = vmatpush.msra.mxu0 %v107
    %635 = vmatpush.msra.mxu0 %v99
    %636 = vmatmul.f32.gmra.mxu0 %v248
    %v637 = vpop.f32.mrf.mxu0
    %v638 = vadd.f32 0.0, %v637
    %639 = vmatmul.f32.gmra.mxu0 %v251
    %v640 = vpop.f32.mrf.mxu0
    %v641 = vadd.f32 0.0, %v640
    %642 = vmatmul.f32.gmra.mxu0 %v254
    %v643 = vpop.f32.mrf.mxu0
    %v644 = vadd.f32 0.0, %v643
    %645 = vmatmul.f32.gmra.mxu0 %v257
    %v646 = vpop.f32.mrf.mxu0
    %v647 = vadd.f32 0.0, %v646
    %648 = vmatmul.f32.gmra.mxu0 %v260
    %v649 = vpop.f32.mrf.mxu0
    %v650 = vadd.f32 0.0, %v649
    %651 = vmatmul.f32.gmra.mxu0 %v263
    %v652 = vpop.f32.mrf.mxu0
    %v653 = vadd.f32 0.0, %v652
    %654 = vmatmul.f32.gmra.mxu0 %v266
    %v655 = vpop.f32.mrf.mxu0
    %v656 = vadd.f32 0.0, %v655
    %657 = vmatmul.f32.gmra.mxu0 %v269
    %v658 = vpop.f32.mrf.mxu0
    %v659 = vadd.f32 0.0, %v658
    %660 = vmatmul.f32.gmra.mxu0 %v272
    %v661 = vpop.f32.mrf.mxu0
    %v662 = vadd.f32 0.0, %v661
    %663 = vmatmul.f32.gmra.mxu0 %v275
    %v664 = vpop.f32.mrf.mxu0
    %v665 = vadd.f32 0.0, %v664
    %666 = vmatmul.f32.gmra.mxu0 %v278
    %v667 = vpop.f32.mrf.mxu0
    %v668 = vadd.f32 0.0, %v667
    %669 = vmatmul.f32.gmra.mxu0 %v281
    %v670 = vpop.f32.mrf.mxu0
    %v671 = vadd.f32 0.0, %v670
    %672 = vmatmul.f32.gmra.mxu0 %v284
    %v673 = vpop.f32.mrf.mxu0
    %v674 = vadd.f32 0.0, %v673
    %675 = vmatmul.f32.gmra.mxu0 %v287
    %v676 = vpop.f32.mrf.mxu0
    %v677 = vadd.f32 0.0, %v676
    %678 = vmatmul.f32.gmra.mxu0 %v290
    %v679 = vpop.f32.mrf.mxu0
    %v680 = vadd.f32 0.0, %v679
    %681 = vmatmul.f32.gmra.mxu0 %v293
    %v682 = vpop.f32.mrf.mxu0
    %v683 = vadd.f32 0.0, %v682
    %684 = vdwg.mxu0
    %685 = vmatpush.msra.mxu0 0.0
    %686 = vmatpush.msra.mxu0 0.0
    %687 = vmatpush.msra.mxu0 0.0
    %688 = vmatpush.msra.mxu0 0.0
    %689 = vmatpush.msra.mxu0 0.0
    %690 = vmatpush.msra.mxu0 0.0
    %691 = vmatpush.msra.mxu0 0.0
    %692 = vmatpush.msra.mxu0 0.0
    %693 = vmatpush.msra.mxu0 0.0
    %694 = vmatpush.msra.mxu0 0.0
    %695 = vmatpush.msra.mxu0 0.0
    %696 = vmatpush.msra.mxu0 0.0
    %697 = vmatpush.msra.mxu0 %v124
    %698 = vmatpush.msra.mxu0 %v116
    %699 = vmatpush.msra.mxu0 %v108
    %700 = vmatpush.msra.mxu0 %v100
    %701 = vmatmul.f32.gmra.mxu0 %v248
    %v702 = vpop.f32.mrf.mxu0
    %v703 = vadd.f32 0.0, %v702
    %704 = vmatmul.f32.gmra.mxu0 %v251
    %v705 = vpop.f32.mrf.mxu0
    %v706 = vadd.f32 0.0, %v705
    %707 = vmatmul.f32.gmra.mxu0 %v254
    %v708 = vpop.f32.mrf.mxu0
    %v709 = vadd.f32 0.0, %v708
    %710 = vmatmul.f32.gmra.mxu0 %v257
    %v711 = vpop.f32.mrf.mxu0
    %v712 = vadd.f32 0.0, %v711
    %713 = vmatmul.f32.gmra.mxu0 %v260
    %v714 = vpop.f32.mrf.mxu0
    %v715 = vadd.f32 0.0, %v714
    %716 = vmatmul.f32.gmra.mxu0 %v263
    %v717 = vpop.f32.mrf.mxu0
    %v718 = vadd.f32 0.0, %v717
    %719 = vmatmul.f32.gmra.mxu0 %v266
    %v720 = vpop.f32.mrf.mxu0
    %v721 = vadd.f32 0.0, %v720
    %722 = vmatmul.f32.gmra.mxu0 %v269
    %v723 = vpop.f32.mrf.mxu0
    %v724 = vadd.f32 0.0, %v723
    %725 = vmatmul.f32.gmra.mxu0 %v272
    %v726 = vpop.f32.mrf.mxu0
    %v727 = vadd.f32 0.0, %v726
    %728 = vmatmul.f32.gmra.mxu0 %v275
    %v729 = vpop.f32.mrf.mxu0
    %v730 = vadd.f32 0.0, %v729
    %731 = vmatmul.f32.gmra.mxu0 %v278
    %v732 = vpop.f32.mrf.mxu0
    %v733 = vadd.f32 0.0, %v732
    %734 = vmatmul.f32.gmra.mxu0 %v281
    %v735 = vpop.f32.mrf.mxu0
    %v736 = vadd.f32 0.0, %v735
    %737 = vmatmul.f32.gmra.mxu0 %v284
    %v738 = vpop.f32.mrf.mxu0
    %v739 = vadd.f32 0.0, %v738
    %740 = vmatmul.f32.gmra.mxu0 %v287
    %v741 = vpop.f32.mrf.mxu0
    %v742 = vadd.f32 0.0, %v741
    %743 = vmatmul.f32.gmra.mxu0 %v290
    %v744 = vpop.f32.mrf.mxu0
    %v745 = vadd.f32 0.0, %v744
    %746 = vmatmul.f32.gmra.mxu0 %v293
    %v747 = vpop.f32.mrf.mxu0
    %v748 = vadd.f32 0.0, %v747
    %749 = vdwg.mxu0
    %750 = vmatpush.msra.mxu0 0.0
    %751 = vmatpush.msra.mxu0 0.0
    %752 = vmatpush.msra.mxu0 0.0
    %753 = vmatpush.msra.mxu0 0.0
    %754 = vmatpush.msra.mxu0 0.0
    %755 = vmatpush.msra.mxu0 0.0
    %756 = vmatpush.msra.mxu0 0.0
    %757 = vmatpush.msra.mxu0 0.0
    %758 = vmatpush.msra.mxu0 0.0
    %759 = vmatpush.msra.mxu0 0.0
    %760 = vmatpush.msra.mxu0 0.0
    %761 = vmatpush.msra.mxu0 0.0
    %762 = vmatpush.msra.mxu0 %v125
    %763 = vmatpush.msra.mxu0 %v117
    %764 = vmatpush.msra.mxu0 %v109
    %765 = vmatpush.msra.mxu0 %v101
    %766 = vmatmul.f32.gmra.mxu0 %v248
    %v767 = vpop.f32.mrf.mxu0
    %v768 = vadd.f32 0.0, %v767
    %769 = vmatmul.f32.gmra.mxu0 %v251
    %v770 = vpop.f32.mrf.mxu0
    %v771 = vadd.f32 0.0, %v770
    %772 = vmatmul.f32.gmra.mxu0 %v254
    %v773 = vpop.f32.mrf.mxu0
    %v774 = vadd.f32 0.0, %v773
    %775 = vmatmul.f32.gmra.mxu0 %v257
    %v776 = vpop.f32.mrf.mxu0
    %v777 = vadd.f32 0.0, %v776
    %778 = vmatmul.f32.gmra.mxu0 %v260
    %v779 = vpop.f32.mrf.mxu0
    %v780 = vadd.f32 0.0, %v779
    %781 = vmatmul.f32.gmra.mxu0 %v263
    %v782 = vpop.f32.mrf.mxu0
    %v783 = vadd.f32 0.0, %v782
    %784 = vmatmul.f32.gmra.mxu0 %v266
    %v785 = vpop.f32.mrf.mxu0
    %v786 = vadd.f32 0.0, %v785
    %787 = vmatmul.f32.gmra.mxu0 %v269
    %v788 = vpop.f32.mrf.mxu0
    %v789 = vadd.f32 0.0, %v788
    %790 = vmatmul.f32.gmra.mxu0 %v272
    %v791 = vpop.f32.mrf.mxu0
    %v792 = vadd.f32 0.0, %v791
    %793 = vmatmul.f32.gmra.mxu0 %v275
    %v794 = vpop.f32.mrf.mxu0
    %v795 = vadd.f32 0.0, %v794
    %796 = vmatmul.f32.gmra.mxu0 %v278
    %v797 = vpop.f32.mrf.mxu0
    %v798 = vadd.f32 0.0, %v797
    %799 = vmatmul.f32.gmra.mxu0 %v281
    %v800 = vpop.f32.mrf.mxu0
    %v801 = vadd.f32 0.0, %v800
    %802 = vmatmul.f32.gmra.mxu0 %v284
    %v803 = vpop.f32.mrf.mxu0
    %v804 = vadd.f32 0.0, %v803
    %805 = vmatmul.f32.gmra.mxu0 %v287
    %v806 = vpop.f32.mrf.mxu0
    %v807 = vadd.f32 0.0, %v806
    %808 = vmatmul.f32.gmra.mxu0 %v290
    %v809 = vpop.f32.mrf.mxu0
    %v810 = vadd.f32 0.0, %v809
    %811 = vmatmul.f32.gmra.mxu0 %v293
    %v812 = vpop.f32.mrf.mxu0
    %v813 = vadd.f32 0.0, %v812
    %814 = vdwg.mxu0
    %v815 = vmul.f32 %v198, %v313
    %v816 = vmul.f32 %v199, %v378
    %v817 = vmul.f32 %v200, %v443
    %v818 = vmul.f32 %v201, %v508
    %v819 = vmul.f32 %v202, %v573
    %v820 = vmul.f32 %v203, %v638
    %v821 = vmul.f32 %v204, %v703
    %v822 = vmul.f32 %v205, %v768
    %v823 = vmul.f32 %v206, %v316
    %v824 = vmul.f32 %v207, %v381
    %v825 = vmul.f32 %v208, %v446
    %v826 = vmul.f32 %v209, %v511
    %v827 = vmul.f32 %v210, %v576
    %v828 = vmul.f32 %v211, %v641
    %v829 = vmul.f32 %v212, %v706
    %v830 = vmul.f32 %v213, %v771
    %v831 = vmul.f32 %v214, %v319
    %v832 = vmul.f32 %v215, %v384
    %v833 = vmul.f32 %v216, %v449
    %v834 = vmul.f32 %v217, %v514
    %v835 = vmul.f32 %v218, %v579
    %v836 = vmul.f32 %v219, %v644
    %v837 = vmul.f32 %v220, %v709
    %v838 = vmul.f32 %v221, %v774
    %v839 = vmul.f32 %v222, %v322
    %v840 = vmul.f32 %v223, %v387
    %v841 = vmul.f32 %v224, %v452
    %v842 = vmul.f32 %v225, %v517
    %v843 = vmul.f32 %v226, %v582
    %v844 = vmul.f32 %v227, %v647
    %v845 = vmul.f32 %v228, %v712
    %v846 = vmul.f32 %v229, %v777
    %v847 = vadd.f32 %v815, %v823
    %v848 = vadd.f32 %v847, %v831
    %v849 = vadd.f32 %v848, %v839
    %v850 = vrot.slane %v849, 4
    %v851 = vadd.f32 %v849, %v850
    %v852 = vrot.slane %v851, 2
    %v853 = vadd.f32 %v851, %v852
    %v854 = vrot.slane %v853, 1
    %v855 = vadd.f32 %v853, %v854
    %v856 = vadd.f32 %v816, %v824
    %v857 = vadd.f32 %v856, %v832
    %v858 = vadd.f32 %v857, %v840
    %v859 = vrot.slane %v858, 4
    %v860 = vadd.f32 %v858, %v859
    %v861 = vrot.slane %v860, 2
    %v862 = vadd.f32 %v860, %v861
    %v863 = vrot.slane %v862, 1
    %v864 = vadd.f32 %v862, %v863
    %v865 = vadd.f32 %v817, %v825
    %v866 = vadd.f32 %v865, %v833
    %v867 = vadd.f32 %v866, %v841
    %v868 = vrot.slane %v867, 4
    %v869 = vadd.f32 %v867, %v868
    %v870 = vrot.slane %v869, 2
    %v871 = vadd.f32 %v869, %v870
    %v872 = vrot.slane %v871, 1
    %v873 = vadd.f32 %v871, %v872
    %v874 = vadd.f32 %v818, %v826
    %v875 = vadd.f32 %v874, %v834
    %v876 = vadd.f32 %v875, %v842
    %v877 = vrot.slane %v876, 4
    %v878 = vadd.f32 %v876, %v877
    %v879 = vrot.slane %v878, 2
    %v880 = vadd.f32 %v878, %v879
    %v881 = vrot.slane %v880, 1
    %v882 = vadd.f32 %v880, %v881
    %v883 = vadd.f32 %v819, %v827
    %v884 = vadd.f32 %v883, %v835
    %v885 = vadd.f32 %v884, %v843
    %v886 = vrot.slane %v885, 4
    %v887 = vadd.f32 %v885, %v886
    %v888 = vrot.slane %v887, 2
    %v889 = vadd.f32 %v887, %v888
    %v890 = vrot.slane %v889, 1
    %v891 = vadd.f32 %v889, %v890
    %v892 = vadd.f32 %v820, %v828
    %v893 = vadd.f32 %v892, %v836
    %v894 = vadd.f32 %v893, %v844
    %v895 = vrot.slane %v894, 4
    %v896 = vadd.f32 %v894, %v895
    %v897 = vrot.slane %v896, 2
    %v898 = vadd.f32 %v896, %v897
    %v899 = vrot.slane %v898, 1
    %v900 = vadd.f32 %v898, %v899
    %v901 = vadd.f32 %v821, %v829
    %v902 = vadd.f32 %v901, %v837
    %v903 = vadd.f32 %v902, %v845
    %v904 = vrot.slane %v903, 4
    %v905 = vadd.f32 %v903, %v904
    %v906 = vrot.slane %v905, 2
    %v907 = vadd.f32 %v905, %v906
    %v908 = vrot.slane %v907, 1
    %v909 = vadd.f32 %v907, %v908
    %v910 = vadd.f32 %v822, %v830
    %v911 = vadd.f32 %v910, %v838
    %v912 = vadd.f32 %v911, %v846
    %v913 = vrot.slane %v912, 4
    %v914 = vadd.f32 %v912, %v913
    %v915 = vrot.slane %v914, 2
    %v916 = vadd.f32 %v914, %v915
    %v917 = vrot.slane %v916, 1
    %v918 = vadd.f32 %v916, %v917
    %v919 = vmul.f32 %v198, %v325
    %v920 = vmul.f32 %v199, %v390
    %v921 = vmul.f32 %v200, %v455
    %v922 = vmul.f32 %v201, %v520
    %v923 = vmul.f32 %v202, %v585
    %v924 = vmul.f32 %v203, %v650
    %v925 = vmul.f32 %v204, %v715
    %v926 = vmul.f32 %v205, %v780
    %v927 = vmul.f32 %v206, %v328
    %v928 = vmul.f32 %v207, %v393
    %v929 = vmul.f32 %v208, %v458
    %v930 = vmul.f32 %v209, %v523
    %v931 = vmul.f32 %v210, %v588
    %v932 = vmul.f32 %v211, %v653
    %v933 = vmul.f32 %v212, %v718
    %v934 = vmul.f32 %v213, %v783
    %v935 = vmul.f32 %v214, %v331
    %v936 = vmul.f32 %v215, %v396
    %v937 = vmul.f32 %v216, %v461
    %v938 = vmul.f32 %v217, %v526
    %v939 = vmul.f32 %v218, %v591
    %v940 = vmul.f32 %v219, %v656
    %v941 = vmul.f32 %v220, %v721
    %v942 = vmul.f32 %v221, %v786
    %v943 = vmul.f32 %v222, %v334
    %v944 = vmul.f32 %v223, %v399
    %v945 = vmul.f32 %v224, %v464
    %v946 = vmul.f32 %v225, %v529
    %v947 = vmul.f32 %v226, %v594
    %v948 = vmul.f32 %v227, %v659
    %v949 = vmul.f32 %v228, %v724
    %v950 = vmul.f32 %v229, %v789
    %v951 = vadd.f32 %v919, %v927
    %v952 = vadd.f32 %v951, %v935
    %v953 = vadd.f32 %v952, %v943
    %v954 = vrot.slane %v953, 4
    %v955 = vadd.f32 %v953, %v954
    %v956 = vrot.slane %v955, 2
    %v957 = vadd.f32 %v955, %v956
    %v958 = vrot.slane %v957, 1
    %v959 = vadd.f32 %v957, %v958
    %v960 = vadd.f32 %v920, %v928
    %v961 = vadd.f32 %v960, %v936
    %v962 = vadd.f32 %v961, %v944
    %v963 = vrot.slane %v962, 4
    %v964 = vadd.f32 %v962, %v963
    %v965 = vrot.slane %v964, 2
    %v966 = vadd.f32 %v964, %v965
    %v967 = vrot.slane %v966, 1
    %v968 = vadd.f32 %v966, %v967
    %v969 = vadd.f32 %v921, %v929
    %v970 = vadd.f32 %v969, %v937
    %v971 = vadd.f32 %v970, %v945
    %v972 = vrot.slane %v971, 4
    %v973 = vadd.f32 %v971, %v972
    %v974 = vrot.slane %v973, 2
    %v975 = vadd.f32 %v973, %v974
    %v976 = vrot.slane %v975, 1
    %v977 = vadd.f32 %v975, %v976
    %v978 = vadd.f32 %v922, %v930
    %v979 = vadd.f32 %v978, %v938
    %v980 = vadd.f32 %v979, %v946
    %v981 = vrot.slane %v980, 4
    %v982 = vadd.f32 %v980, %v981
    %v983 = vrot.slane %v982, 2
    %v984 = vadd.f32 %v982, %v983
    %v985 = vrot.slane %v984, 1
    %v986 = vadd.f32 %v984, %v985
    %v987 = vadd.f32 %v923, %v931
    %v988 = vadd.f32 %v987, %v939
    %v989 = vadd.f32 %v988, %v947
    %v990 = vrot.slane %v989, 4
    %v991 = vadd.f32 %v989, %v990
    %v992 = vrot.slane %v991, 2
    %v993 = vadd.f32 %v991, %v992
    %v994 = vrot.slane %v993, 1
    %v995 = vadd.f32 %v993, %v994
    %v996 = vadd.f32 %v924, %v932
    %v997 = vadd.f32 %v996, %v940
    %v998 = vadd.f32 %v997, %v948
    %v999 = vrot.slane %v998, 4
    %v1000 = vadd.f32 %v998, %v999
    %v1001 = vrot.slane %v1000, 2
    %v1002 = vadd.f32 %v1000, %v1001
    %v1003 = vrot.slane %v1002, 1
    %v1004 = vadd.f32 %v1002, %v1003
    %v1005 = vadd.f32 %v925, %v933
    %v1006 = vadd.f32 %v1005, %v941
    %v1007 = vadd.f32 %v1006, %v949
    %v1008 = vrot.slane %v1007, 4
    %v1009 = vadd.f32 %v1007, %v1008
    %v1010 = vrot.slane %v1009, 2
    %v1011 = vadd.f32 %v1009, %v1010
    %v1012 = vrot.slane %v1011, 1
    %v1013 = vadd.f32 %v1011, %v1012
    %v1014 = vadd.f32 %v926, %v934
    %v1015 = vadd.f32 %v1014, %v942
    %v1016 = vadd.f32 %v1015, %v950
    %v1017 = vrot.slane %v1016, 4
    %v1018 = vadd.f32 %v1016, %v1017
    %v1019 = vrot.slane %v1018, 2
    %v1020 = vadd.f32 %v1018, %v1019
    %v1021 = vrot.slane %v1020, 1
    %v1022 = vadd.f32 %v1020, %v1021
    %v1023 = vmul.f32 %v198, %v337
    %v1024 = vmul.f32 %v199, %v402
    %v1025 = vmul.f32 %v200, %v467
    %v1026 = vmul.f32 %v201, %v532
    %v1027 = vmul.f32 %v202, %v597
    %v1028 = vmul.f32 %v203, %v662
    %v1029 = vmul.f32 %v204, %v727
    %v1030 = vmul.f32 %v205, %v792
    %v1031 = vmul.f32 %v206, %v340
    %v1032 = vmul.f32 %v207, %v405
    %v1033 = vmul.f32 %v208, %v470
    %v1034 = vmul.f32 %v209, %v535
    %v1035 = vmul.f32 %v210, %v600
    %v1036 = vmul.f32 %v211, %v665
    %v1037 = vmul.f32 %v212, %v730
    %v1038 = vmul.f32 %v213, %v795
    %v1039 = vmul.f32 %v214, %v343
    %v1040 = vmul.f32 %v215, %v408
    %v1041 = vmul.f32 %v216, %v473
    %v1042 = vmul.f32 %v217, %v538
    %v1043 = vmul.f32 %v218, %v603
    %v1044 = vmul.f32 %v219, %v668
    %v1045 = vmul.f32 %v220, %v733
    %v1046 = vmul.f32 %v221, %v798
    %v1047 = vmul.f32 %v222, %v346
    %v1048 = vmul.f32 %v223, %v411
    %v1049 = vmul.f32 %v224, %v476
    %v1050 = vmul.f32 %v225, %v541
    %v1051 = vmul.f32 %v226, %v606
    %v1052 = vmul.f32 %v227, %v671
    %v1053 = vmul.f32 %v228, %v736
    %v1054 = vmul.f32 %v229, %v801
    %v1055 = vadd.f32 %v1023, %v1031
    %v1056 = vadd.f32 %v1055, %v1039
    %v1057 = vadd.f32 %v1056, %v1047
    %v1058 = vrot.slane %v1057, 4
    %v1059 = vadd.f32 %v1057, %v1058
    %v1060 = vrot.slane %v1059, 2
    %v1061 = vadd.f32 %v1059, %v1060
    %v1062 = vrot.slane %v1061, 1
    %v1063 = vadd.f32 %v1061, %v1062
    %v1064 = vadd.f32 %v1024, %v1032
    %v1065 = vadd.f32 %v1064, %v1040
    %v1066 = vadd.f32 %v1065, %v1048
    %v1067 = vrot.slane %v1066, 4
    %v1068 = vadd.f32 %v1066, %v1067
    %v1069 = vrot.slane %v1068, 2
    %v1070 = vadd.f32 %v1068, %v1069
    %v1071 = vrot.slane %v1070, 1
    %v1072 = vadd.f32 %v1070, %v1071
    %v1073 = vadd.f32 %v1025, %v1033
    %v1074 = vadd.f32 %v1073, %v1041
    %v1075 = vadd.f32 %v1074, %v1049
    %v1076 = vrot.slane %v1075, 4
    %v1077 = vadd.f32 %v1075, %v1076
    %v1078 = vrot.slane %v1077, 2
    %v1079 = vadd.f32 %v1077, %v1078
    %v1080 = vrot.slane %v1079, 1
    %v1081 = vadd.f32 %v1079, %v1080
    %v1082 = vadd.f32 %v1026, %v1034
    %v1083 = vadd.f32 %v1082, %v1042
    %v1084 = vadd.f32 %v1083, %v1050
    %v1085 = vrot.slane %v1084, 4
    %v1086 = vadd.f32 %v1084, %v1085
    %v1087 = vrot.slane %v1086, 2
    %v1088 = vadd.f32 %v1086, %v1087
    %v1089 = vrot.slane %v1088, 1
    %v1090 = vadd.f32 %v1088, %v1089
    %v1091 = vadd.f32 %v1027, %v1035
    %v1092 = vadd.f32 %v1091, %v1043
    %v1093 = vadd.f32 %v1092, %v1051
    %v1094 = vrot.slane %v1093, 4
    %v1095 = vadd.f32 %v1093, %v1094
    %v1096 = vrot.slane %v1095, 2
    %v1097 = vadd.f32 %v1095, %v1096
    %v1098 = vrot.slane %v1097, 1
    %v1099 = vadd.f32 %v1097, %v1098
    %v1100 = vadd.f32 %v1028, %v1036
    %v1101 = vadd.f32 %v1100, %v1044
    %v1102 = vadd.f32 %v1101, %v1052
    %v1103 = vrot.slane %v1102, 4
    %v1104 = vadd.f32 %v1102, %v1103
    %v1105 = vrot.slane %v1104, 2
    %v1106 = vadd.f32 %v1104, %v1105
    %v1107 = vrot.slane %v1106, 1
    %v1108 = vadd.f32 %v1106, %v1107
    %v1109 = vadd.f32 %v1029, %v1037
    %v1110 = vadd.f32 %v1109, %v1045
    %v1111 = vadd.f32 %v1110, %v1053
    %v1112 = vrot.slane %v1111, 4
    %v1113 = vadd.f32 %v1111, %v1112
    %v1114 = vrot.slane %v1113, 2
    %v1115 = vadd.f32 %v1113, %v1114
    %v1116 = vrot.slane %v1115, 1
    %v1117 = vadd.f32 %v1115, %v1116
    %v1118 = vadd.f32 %v1030, %v1038
    %v1119 = vadd.f32 %v1118, %v1046
    %v1120 = vadd.f32 %v1119, %v1054
    %v1121 = vrot.slane %v1120, 4
    %v1122 = vadd.f32 %v1120, %v1121
    %v1123 = vrot.slane %v1122, 2
    %v1124 = vadd.f32 %v1122, %v1123
    %v1125 = vrot.slane %v1124, 1
    %v1126 = vadd.f32 %v1124, %v1125
    %v1127 = vmul.f32 %v198, %v349
    %v1128 = vmul.f32 %v199, %v414
    %v1129 = vmul.f32 %v200, %v479
    %v1130 = vmul.f32 %v201, %v544
    %v1131 = vmul.f32 %v202, %v609
    %v1132 = vmul.f32 %v203, %v674
    %v1133 = vmul.f32 %v204, %v739
    %v1134 = vmul.f32 %v205, %v804
    %v1135 = vmul.f32 %v206, %v352
    %v1136 = vmul.f32 %v207, %v417
    %v1137 = vmul.f32 %v208, %v482
    %v1138 = vmul.f32 %v209, %v547
    %v1139 = vmul.f32 %v210, %v612
    %v1140 = vmul.f32 %v211, %v677
    %v1141 = vmul.f32 %v212, %v742
    %v1142 = vmul.f32 %v213, %v807
    %v1143 = vmul.f32 %v214, %v355
    %v1144 = vmul.f32 %v215, %v420
    %v1145 = vmul.f32 %v216, %v485
    %v1146 = vmul.f32 %v217, %v550
    %v1147 = vmul.f32 %v218, %v615
    %v1148 = vmul.f32 %v219, %v680
    %v1149 = vmul.f32 %v220, %v745
    %v1150 = vmul.f32 %v221, %v810
    %v1151 = vmul.f32 %v222, %v358
    %v1152 = vmul.f32 %v223, %v423
    %v1153 = vmul.f32 %v224, %v488
    %v1154 = vmul.f32 %v225, %v553
    %v1155 = vmul.f32 %v226, %v618
    %v1156 = vmul.f32 %v227, %v683
    %v1157 = vmul.f32 %v228, %v748
    %v1158 = vmul.f32 %v229, %v813
    %v1159 = vadd.f32 %v1127, %v1135
    %v1160 = vadd.f32 %v1159, %v1143
    %v1161 = vadd.f32 %v1160, %v1151
    %v1162 = vrot.slane %v1161, 4
    %v1163 = vadd.f32 %v1161, %v1162
    %v1164 = vrot.slane %v1163, 2
    %v1165 = vadd.f32 %v1163, %v1164
    %v1166 = vrot.slane %v1165, 1
    %v1167 = vadd.f32 %v1165, %v1166
    %v1168 = vadd.f32 %v1128, %v1136
    %v1169 = vadd.f32 %v1168, %v1144
    %v1170 = vadd.f32 %v1169, %v1152
    %v1171 = vrot.slane %v1170, 4
    %v1172 = vadd.f32 %v1170, %v1171
    %v1173 = vrot.slane %v1172, 2
    %v1174 = vadd.f32 %v1172, %v1173
    %v1175 = vrot.slane %v1174, 1
    %v1176 = vadd.f32 %v1174, %v1175
    %v1177 = vadd.f32 %v1129, %v1137
    %v1178 = vadd.f32 %v1177, %v1145
    %v1179 = vadd.f32 %v1178, %v1153
    %v1180 = vrot.slane %v1179, 4
    %v1181 = vadd.f32 %v1179, %v1180
    %v1182 = vrot.slane %v1181, 2
    %v1183 = vadd.f32 %v1181, %v1182
    %v1184 = vrot.slane %v1183, 1
    %v1185 = vadd.f32 %v1183, %v1184
    %v1186 = vadd.f32 %v1130, %v1138
    %v1187 = vadd.f32 %v1186, %v1146
    %v1188 = vadd.f32 %v1187, %v1154
    %v1189 = vrot.slane %v1188, 4
    %v1190 = vadd.f32 %v1188, %v1189
    %v1191 = vrot.slane %v1190, 2
    %v1192 = vadd.f32 %v1190, %v1191
    %v1193 = vrot.slane %v1192, 1
    %v1194 = vadd.f32 %v1192, %v1193
    %v1195 = vadd.f32 %v1131, %v1139
    %v1196 = vadd.f32 %v1195, %v1147
    %v1197 = vadd.f32 %v1196, %v1155
    %v1198 = vrot.slane %v1197, 4
    %v1199 = vadd.f32 %v1197, %v1198
    %v1200 = vrot.slane %v1199, 2
    %v1201 = vadd.f32 %v1199, %v1200
    %v1202 = vrot.slane %v1201, 1
    %v1203 = vadd.f32 %v1201, %v1202
    %v1204 = vadd.f32 %v1132, %v1140
    %v1205 = vadd.f32 %v1204, %v1148
    %v1206 = vadd.f32 %v1205, %v1156
    %v1207 = vrot.slane %v1206, 4
    %v1208 = vadd.f32 %v1206, %v1207
    %v1209 = vrot.slane %v1208, 2
    %v1210 = vadd.f32 %v1208, %v1209
    %v1211 = vrot.slane %v1210, 1
    %v1212 = vadd.f32 %v1210, %v1211
    %v1213 = vadd.f32 %v1133, %v1141
    %v1214 = vadd.f32 %v1213, %v1149
    %v1215 = vadd.f32 %v1214, %v1157
    %v1216 = vrot.slane %v1215, 4
    %v1217 = vadd.f32 %v1215, %v1216
    %v1218 = vrot.slane %v1217, 2
    %v1219 = vadd.f32 %v1217, %v1218
    %v1220 = vrot.slane %v1219, 1
    %v1221 = vadd.f32 %v1219, %v1220
    %v1222 = vadd.f32 %v1134, %v1142
    %v1223 = vadd.f32 %v1222, %v1150
    %v1224 = vadd.f32 %v1223, %v1158
    %v1225 = vrot.slane %v1224, 4
    %v1226 = vadd.f32 %v1224, %v1225
    %v1227 = vrot.slane %v1226, 2
    %v1228 = vadd.f32 %v1226, %v1227
    %v1229 = vrot.slane %v1228, 1
    %v1230 = vadd.f32 %v1228, %v1229
    %vm1231 = vcmask 1040384
    %v1232 = vsel %vm1231, %v855, %v959
    %v1233 = vsel %vm1231, %v864, %v968
    %v1234 = vsel %vm1231, %v873, %v977
    %v1235 = vsel %vm1231, %v882, %v986
    %v1236 = vsel %vm1231, %v891, %v995
    %v1237 = vsel %vm1231, %v900, %v1004
    %v1238 = vsel %vm1231, %v909, %v1013
    %v1239 = vsel %vm1231, %v918, %v1022
    %vm1240 = vcmask 1041408
    %v1241 = vsel %vm1240, %v1232, %v1063
    %v1242 = vsel %vm1240, %v1233, %v1072
    %v1243 = vsel %vm1240, %v1234, %v1081
    %v1244 = vsel %vm1240, %v1235, %v1090
    %v1245 = vsel %vm1240, %v1236, %v1099
    %v1246 = vsel %vm1240, %v1237, %v1108
    %v1247 = vsel %vm1240, %v1238, %v1117
    %v1248 = vsel %vm1240, %v1239, %v1126
    %vm1249 = vcmask 1042432
    %v1250 = vsel %vm1249, %v1241, %v1167
    %v1251 = vsel %vm1249, %v1242, %v1176
    %v1252 = vsel %vm1249, %v1243, %v1185
    %v1253 = vsel %vm1249, %v1244, %v1194
    %v1254 = vsel %vm1249, %v1245, %v1203
    %v1255 = vsel %vm1249, %v1246, %v1212
    %v1256 = vsel %vm1249, %v1247, %v1221
    %v1257 = vsel %vm1249, %v1248, %v1230
    %v1266 = vrot.slane %v1251, 4
    %v1267 = vrot.slane %v1253, 4
    %v1268 = vrot.slane %v1255, 4
    %v1269 = vrot.slane %v1257, 4
    %vm1270 = vcmask 1043456
    %v1271 = vsel %vm1270, %v1250, %v1266
    %v1272 = vsel %vm1270, %v1252, %v1267
    %v1273 = vsel %vm1270, %v1254, %v1268
    %v1274 = vsel %vm1270, %v1256, %v1269
    %1279 = vst [vmem:[#allocation2] sm:$0xff] %v1271
    %1280 = vst [vmem:[#allocation2 + $0x8] sm:$0xff] %v1272
    %1281 = vst [vmem:[#allocation2 + $0x10] sm:$0xff] %v1273
    %1282 = vst [vmem:[#allocation2 + $0x18] sm:$0xff] %v1274
    // Predicated region
    $region14: #{tpu_custom_call.1} parent=1 // pred_check
      _
    $region15: #{tpu_custom_call.1} parent=1 // pred_check_branch
      %1284 = sbr.rel (0) target = $region17
    $region16: #{tpu_custom_call.1} parent=1 // pred_region
      %1286 = vsyncadd [#allocation3], 0
      %s1288 = sshll.u32 [#allocation2], 4
      %s1289 = int_to_ptr.vmem [resolvable:$true] %s1288
      %s1290 = sshll.u32 %s3, 4
      %s1291 = int_to_ptr.hbm [resolvable:$true] %s1290
      %1293 = dma.vmem_to_hbm [thread:$0]  %s1289, 512, %s1291, [#allocation3]
    $region17: #{tpu_custom_call.1} parent=1 // pred_fallthru
      _
    // Predicated region
    $region18: #{tpu_custom_call.1} parent=1 // pred_check
      _
    $region19: #{tpu_custom_call.1} parent=1 // pred_check_branch
      %1295 = sbr.rel (0) target = $region21
    $region20: #{tpu_custom_call.1} parent=1 // pred_region
      %1297 = dma.done [#allocation3], 512
    $region21: #{tpu_custom_call.1} parent=1 // pred_fallthru
      _
    %1298 = vsyncpa [#allocation3], 1

</llo_original>
